<compile_context>
chip_gen: v7x
topology: tpu7x:2x2x1
jax: 0.10.0
libtpu: 0.0.40
codegen_flags: <defaults>
</compile_context>

<pallas_src>
import numpy as np
import jax
import jax.numpy as jnp
from jax.experimental import pallas as pl
from jax.experimental.pallas import tpu as pltpu


def _round_up(x, m):
    return ((x + m - 1) // m) * m


def potts_kernel(x_ref, selT_ref, coef_ref, out_ref):
    """One (batch tile, term tile) grid step.

    x_ref:    (Bt, N)      bf16 spin values for Bt batch rows
    selT_ref: (D, N, Tt)   bf16 one-hot gather matrix, one (N, Tt) per degree
    coef_ref: (Tt, 1)      f32 per-term coefficients (0 for padded terms)
    out_ref:  (Bt, 1)      f32 per-row energies, accumulated over term tiles
    """
    j = pl.program_id(1)

    @pl.when(j == 0)
    def _():
        out_ref[...] = jnp.zeros_like(out_ref)

    d_max = selT_ref.shape[0]
    x = x_ref[...]

    # Per-degree gather matmuls with fused max/min accumulation: the full
    # (Bt, D*Tt) gather intermediate is never materialized.
    g = jnp.dot(x, selT_ref[0], preferred_element_type=jnp.float32)  # (Bt, Tt)
    mx = g
    mn = g
    for d in range(1, d_max):
        gd = jnp.dot(x, selT_ref[d], preferred_element_type=jnp.float32)
        mx = jnp.maximum(mx, gd)
        mn = jnp.minimum(mn, gd)

    ind = (mx == mn).astype(jnp.float32)                              # (Bt, Tt)

    # Weighted sum over this term tile (MXU), accumulated into the resident
    # output block across the "arbitrary" term axis.
    out_ref[...] += jnp.dot(ind, coef_ref[...],
                            preferred_element_type=jnp.float32)


def build_potts_params(coefficients, num_spins):
    """Dense encoding of the coefficient dict (plain numpy, runs once)."""
    keys = [tuple(k) for k in coefficients.keys()]
    num_terms = len(keys)
    degree = max(len(k) for k in keys)
    t_pad = _round_up(num_terms, 128)     # lane-aligned term dimension

    selT = np.zeros((degree, num_spins, t_pad), np.float32)
    coef = np.zeros((t_pad, 1), np.float32)
    for t, k in enumerate(keys):
        # TODO(synk): complex-valued coefficients (allowed by the PyTorch type
        # hint) are not supported in this real-valued kernel path.
        coef[t, 0] = float(coefficients[k])
        for d in range(degree):
            idx = k[d] if d < len(k) else k[0]  # repeat key[0]: max/min unchanged
            selT[d, idx, t] = 1.0
    # bf16 selector entries are 0/1 (exact); halves HBM/VMEM footprint and
    # doubles MXU rate on v6e/v7x.
    return jnp.asarray(selT, dtype=jnp.bfloat16), jnp.asarray(coef)


def _vmem_budget_bytes():
    """Generation-aware VMEM budget: ~3/4 of physical VMEM, capped at 96 MiB
    (v5e/v6e: 128 MiB -> 96 MiB; v7x: 64 MiB -> 48 MiB)."""
    cap = 64 * 1024 * 1024
    try:
        info = pltpu.get_tpu_info()
        cap = int(getattr(info, "vmem_capacity_bytes", cap))
    except Exception:
        pass
    return int(min(96 * 1024 * 1024, (cap * 3) // 4))


def potts_forward(x, selT, coef, *, block_b=2048, block_t=4096):
    """x: (..., N) integer-valued spins (any float/int dtype) -> (...,) f32."""
    *lead, n_spins = x.shape
    # Integer spin values < 256 are exact in bf16; the one-hot gather then
    # reproduces them bit-exactly, so eq(max, min) has no false results.
    x2 = x.reshape(-1, n_spins).astype(jnp.bfloat16)
    b_total = x2.shape[0]

    d_max, _, t_pad = selT.shape
    budget = _vmem_budget_bytes()
    tile_budget = (budget * 4) // 5                 # headroom for compiler scratch

    # ---- term tile Tt: keep the streamed selT block <= ~1/4 of the budget.
    selT_bytes_per_col = d_max * n_spins * 2        # bf16
    tt_cap = (tile_budget // 4) // (2 * selT_bytes_per_col)   # 2 buffers
    tt = max(128, min(block_t, t_pad, (tt_cap // 128) * 128))
    t_full = _round_up(t_pad, tt)
    if t_full != t_pad:
        # Padded terms: all-zero selector columns + zero coefficient -> exactly 0.
        selT = jnp.pad(selT, ((0, 0), (0, 0), (0, t_full - t_pad)))
        coef = jnp.pad(coef, ((0, t_full - t_pad), (0, 0)))
        t_pad = t_full
    n_term_blocks = t_pad // tt

    # ---- batch tile Bt: fill what is left of the budget.
    resident = (2 * d_max * n_spins * tt * 2        # selT blocks (<= 2 buffers)
                + 2 * tt * 4)                       # coef blocks
    per_row = (2 * n_spins * 2                      # x tile, double-buffered bf16
               + 4 * tt * 4                         # g/mx/mn/ind f32 temporaries
               + 2 * 4)                             # out block
    bt_cap = max(8, ((tile_budget - resident) // per_row) // 8 * 8)
    bt = min(block_b, bt_cap, _round_up(b_total, 8))
    # Give v7x's two TensorCores at least 2 parallel batch steps when possible.
    if b_total > 8:
        bt = min(bt, _round_up((b_total + 1) // 2, 8))
    bt = max(8, bt)
    b_pad = _round_up(b_total, bt)
    if b_pad != b_total:
        x2 = jnp.pad(x2, ((0, b_pad - b_total), (0, 0)))

    # Constant-index blocks only need a single buffer (no point double-buffering
    # something that never changes); streamed term blocks keep 2 buffers.
    const_mode = pl.Buffered(1) if n_term_blocks == 1 else pl.Buffered(2)

    out = pl.pallas_call(
        potts_kernel,
        out_shape=jax.ShapeDtypeStruct((b_pad, 1), jnp.float32),
        grid=(b_pad // bt, n_term_blocks),
        in_specs=[
            pl.BlockSpec((bt, n_spins), lambda i, j: (i, 0)),
            pl.BlockSpec((d_max, n_spins, tt), lambda i, j: (0, 0, j),
                         pipeline_mode=const_mode),
            pl.BlockSpec((tt, 1), lambda i, j: (j, 0),
                         pipeline_mode=const_mode),
        ],
        out_specs=pl.BlockSpec((bt, 1), lambda i, j: (i, 0)),
        compiler_params=pltpu.CompilerParams(
            dimension_semantics=("parallel", "arbitrary"),
            vmem_limit_bytes=budget),
    )(x2, selT, coef)
    return out[:b_total, 0].reshape(tuple(lead))


def potts_ref(x, coefficients):
    """Pure-JAX reference mirroring the PyTorch forward exactly."""
    total = jnp.zeros(x.shape[:-1], jnp.float32)
    for key, v in coefficients.items():
        sel = x[..., jnp.asarray(key, dtype=jnp.int32)]
        eq = jnp.max(sel, axis=-1) == jnp.min(sel, axis=-1)
        total = total + v * eq
    return total


if __name__ == "__main__":
    B, N, Q = 256, 16, 4

    # Deterministic coefficient dict: linear fields, ring pairwise couplings,
    # and two cubic interactions (mixed key lengths exercise the slot repeat).
    coefficients = {}
    for i in range(N):
        coefficients[(i,)] = 0.1 * (i + 1)
    for i in range(N):
        coefficients[(i, (i + 1) % N)] = -0.5 * (i + 1)
    coefficients[(0, 3, 5)] = 0.7
    coefficients[(2, 7, 11)] = -1.3

    selT, coef = build_potts_params(coefficients, N)

    # Deterministic integer-valued spin states x: (B, N) with values in [0, Q).
    key = jax.random.PRNGKey(0)
    states = jax.random.randint(key, (B, N), 0, Q)
    x = states.astype(jnp.float32)

    out = jax.block_until_ready(jax.jit(potts_forward)(x, selT, coef))
    ref = jax.block_until_ready(potts_ref(x, coefficients))
    np.testing.assert_allclose(np.asarray(out), np.asarray(ref),
                               rtol=1e-5, atol=1e-5)
    print("KERNEL_OK")
</pallas_src>

<mosaic_0001>
module attributes {stable_mosaic.version = 11 : i64} {
  func.func @potts_kernel(%arg0: i32, %arg1: i32, %arg2: memref<128x16xbf16, #tpu.memory_space<vmem>>, %arg3: memref<3x16x128xbf16, #tpu.memory_space<vmem>>, %arg4: memref<128x1xf32, #tpu.memory_space<vmem>>, %arg5: memref<128x1xf32, #tpu.memory_space<vmem>>) attributes {dimension_semantics = [#tpu.dimension_semantics<parallel>, #tpu.dimension_semantics<arbitrary>], iteration_bounds = array<i64: 2, 1>, scalar_prefetch = 0 : i64, scratch_operands = 0 : i64, tpu.core_type = #tpu.core_type<tc>, window_params = [{transform_indices = @transform_0, window_bounds = array<i64: 128, 16>}, {pipeline_mode = #tpu.pipeline_mode<synchronous>, transform_indices = @transform_1, window_bounds = array<i64: 3, 16, 128>}, {pipeline_mode = #tpu.pipeline_mode<synchronous>, transform_indices = @transform_2, window_bounds = array<i64: 128, 1>}, {transform_indices = @transform_3, window_bounds = array<i64: 128, 1>}]} {
    %c0_i32 = arith.constant 0 : i32
    %0 = arith.cmpi eq, %arg1, %c0_i32 : i32
    %1 = arith.extui %0 : i1 to i32
    %c0_i32_0 = arith.constant 0 : i32
    %2 = arith.cmpi ne, %1, %c0_i32_0 : i32
    scf.if %2 {
      %cst_18 = arith.constant 0.000000e+00 : f32
      %25 = vector.broadcast %cst_18 : f32 to vector<128x1xf32>
      %c0_19 = arith.constant 0 : index
      %c0_20 = arith.constant 0 : index
      %26 = vector.load %arg5[%c0_19, %c0_20] : memref<128x1xf32, #tpu.memory_space<vmem>>, vector<128x1xf32>
      tpu.vector_store %arg5[%c0_19, %c0_20], %25 {strides = array<i32>} : memref<128x1xf32, #tpu.memory_space<vmem>>, vector<128x1xf32>,
    } else {
    }
    %c0 = arith.constant 0 : index
    %c0_1 = arith.constant 0 : index
    %3 = vector.load %arg2[%c0, %c0_1] : memref<128x16xbf16, #tpu.memory_space<vmem>>, vector<128x16xbf16>
    %c0_2 = arith.constant 0 : index
    %c0_3 = arith.constant 0 : index
    %c0_4 = arith.constant 0 : index
    %4 = vector.load %arg3[%c0_2, %c0_3, %c0_4] : memref<3x16x128xbf16, #tpu.memory_space<vmem>>, vector<1x16x128xbf16>
    %5 = vector.shape_cast %4 : vector<1x16x128xbf16> to vector<16x128xbf16>
    %cst = arith.constant dense<0.000000e+00> : vector<128x128xf32>
    %6 = tpu.matmul %3, %5, %cst {dimension_numbers = #tpu.dot_dimension_numbers<[1], [0], [0], [1], [0, 0, 1, 1], [], []>} : vector<128x16xbf16>, vector<16x128xbf16>, vector<128x128xf32> -> vector<128x128xf32>
    %c1 = arith.constant 1 : index
    %c0_5 = arith.constant 0 : index
    %c0_6 = arith.constant 0 : index
    %7 = vector.load %arg3[%c1, %c0_5, %c0_6] : memref<3x16x128xbf16, #tpu.memory_space<vmem>>, vector<1x16x128xbf16>
    %8 = vector.shape_cast %7 : vector<1x16x128xbf16> to vector<16x128xbf16>
    %cst_7 = arith.constant dense<0.000000e+00> : vector<128x128xf32>
    %9 = tpu.matmul %3, %8, %cst_7 {dimension_numbers = #tpu.dot_dimension_numbers<[1], [0], [0], [1], [0, 0, 1, 1], [], []>} : vector<128x16xbf16>, vector<16x128xbf16>, vector<128x128xf32> -> vector<128x128xf32>
    %10 = arith.maximumf %6, %9 : vector<128x128xf32>
    %11 = arith.minimumf %6, %9 : vector<128x128xf32>
    %c2 = arith.constant 2 : index
    %c0_8 = arith.constant 0 : index
    %c0_9 = arith.constant 0 : index
    %12 = vector.load %arg3[%c2, %c0_8, %c0_9] : memref<3x16x128xbf16, #tpu.memory_space<vmem>>, vector<1x16x128xbf16>
    %13 = vector.shape_cast %12 : vector<1x16x128xbf16> to vector<16x128xbf16>
    %cst_10 = arith.constant dense<0.000000e+00> : vector<128x128xf32>
    %14 = tpu.matmul %3, %13, %cst_10 {dimension_numbers = #tpu.dot_dimension_numbers<[1], [0], [0], [1], [0, 0, 1, 1], [], []>} : vector<128x16xbf16>, vector<16x128xbf16>, vector<128x128xf32> -> vector<128x128xf32>
    %15 = arith.maximumf %10, %14 : vector<128x128xf32>
    %16 = arith.minimumf %11, %14 : vector<128x128xf32>
    %17 = arith.cmpf oeq, %15, %16 : vector<128x128xf32>
    %18 = arith.extui %17 : vector<128x128xi1> to vector<128x128xi32>
    %19 = arith.sitofp %18 : vector<128x128xi32> to vector<128x128xf32>
    %c0_11 = arith.constant 0 : index
    %c0_12 = arith.constant 0 : index
    %20 = vector.load %arg5[%c0_11, %c0_12] : memref<128x1xf32, #tpu.memory_space<vmem>>, vector<128x1xf32>
    %c0_13 = arith.constant 0 : index
    %c0_14 = arith.constant 0 : index
    %21 = vector.load %arg4[%c0_13, %c0_14] : memref<128x1xf32, #tpu.memory_space<vmem>>, vector<128x1xf32>
    %cst_15 = arith.constant dense<0.000000e+00> : vector<128x1xf32>
    %22 = tpu.matmul %19, %21, %cst_15 {dimension_numbers = #tpu.dot_dimension_numbers<[1], [0], [0], [1], [0, 0, 1, 1], [], []>} : vector<128x128xf32>, vector<128x1xf32>, vector<128x1xf32> -> vector<128x1xf32>
    %23 = arith.addf %20, %22 : vector<128x1xf32>
    %c0_16 = arith.constant 0 : index
    %c0_17 = arith.constant 0 : index
    %24 = vector.load %arg5[%c0_16, %c0_17] : memref<128x1xf32, #tpu.memory_space<vmem>>, vector<128x1xf32>
    tpu.vector_store %arg5[%c0_16, %c0_17], %23 {strides = array<i32>} : memref<128x1xf32, #tpu.memory_space<vmem>>, vector<128x1xf32>,
    return
  }
  func.func @transform_0(%arg0: i32, %arg1: i32) -> (i32, i32) {
    %c0_i32 = arith.constant 0 : i32
    %c0_i32_0 = arith.constant 0 : i32
    return %arg0, %c0_i32 : i32, i32
  }
  func.func @transform_1(%arg0: i32, %arg1: i32) -> (i32, i32, i32) {
    %c0_i32 = arith.constant 0 : i32
    %c0_i32_0 = arith.constant 0 : i32
    %c0_i32_1 = arith.constant 0 : i32
    return %c0_i32, %c0_i32_0, %arg1 : i32, i32, i32
  }
  func.func @transform_2(%arg0: i32, %arg1: i32) -> (i32, i32) {
    %c0_i32 = arith.constant 0 : i32
    %c0_i32_0 = arith.constant 0 : i32
    return %arg1, %c0_i32 : i32, i32
  }
  func.func @transform_3(%arg0: i32, %arg1: i32) -> (i32, i32) {
    %c0_i32 = arith.constant 0 : i32
    %c0_i32_0 = arith.constant 0 : i32
    return %arg0, %c0_i32 : i32, i32
  }
}

</mosaic_0001>

<llo_original>
// kernel: potts_forward.1
$region0: #{potts_forward.1}
  #allocation0 [shape = 'u32[]', space=smem, size = 0x4, offset = 0x4, fixed_abs, tag = 'smem constant byte address 0x4 - core index']
  #allocation1 [shape = 'u32[144,128]{1,0:T(1,128)}', space=vmem, size = 0x12000, scoped, tag = 'internal scratch']
  %s0 = inlined_call_operand.vmem [shape: bf16[256,16], index: 0, kind: input, shape index: {}]
  %s1 = inlined_call_operand.vmem [shape: bf16[3,16,128], index: 1, kind: input, shape index: {}]
  %s2 = inlined_call_operand.vmem [shape: f32[128,1], index: 2, kind: input, shape index: {}]
  %s3 = inlined_call_operand.vmem [shape: f32[256,1], index: 3, kind: output, shape index: {}]
  %s4 = sld [smem:[#allocation0]]
  $region49: #{potts_forward.1} parent=0
    _
  %s6 = ssub.s32 1, %s4
  %s7 = scalar_select 0, %s6, %s4
  loop: start=0, step=1, limit=4
  $region2: #{potts_forward.1} parent=0 // loop_pre_header
    _
  $region3: #{potts_forward.1} parent=0 // loop_header
    %s9 = sphi 0, %s13
    %p10 = scmp.ge.s32.totalorder %s9, 4
    %s16 = sphi 0, %s28
    %s17 = sphi 0, %s24
    %s18 = sphi 0, %s16
    %s19 = sphi 0, %s17
    %s20 = sphi 0, %s18
    %s21 = sphi 0, %s19
    %s31 = sphi 0, %s33
    %s34 = sphi 0, %s31
    %s35 = sphi 0, %s34
    %s51 = sphi 0, %s35
    %s57 = sphi 0, %s59
    %s60 = sphi 0, %s57
    %s61 = sphi 0, %s60
    %s77 = sphi 0, %s61
    %s83 = sphi 0, %s85
    %s86 = sphi 0, %s83
    %s87 = sphi 0, %s86
    %s103 = sphi 0, %s87
    %s109 = sphi 0, %s111
    %s112 = sphi 0, %s109
    %s113 = sphi 0, %s112
    %s129 = sphi 0, %s113
  $region4: #{potts_forward.1} parent=0 // loop_header_branch
    %12 = sbr.rel (%p10) target = $region8
  $region5: #{potts_forward.1} parent=0 // loop_body
    %s14 = ssub.s32 %s9, 1
    %s15 = ssub.s32 %s9, 2
    %s22 = sadd.s32 1, %s17
    %p23 = scmp.ge.s32.totalorder %s22, 1
    %s24 = scalar_select %p23, 0, %s22
    %s25 = sadd.s32 1, %s16
    %s26 = scalar_select %p23, %s25, %s16
    %p27 = scmp.ge.s32.totalorder %s26, 2
    %s28 = scalar_select %p27, 0, %s26
    %s29 = ssub.s32 %s16, %s28
    %p30 = scmp.eq.s32.totalorder %s29, 0
    %s32 = sadd.s32 %s31, 1
    %s33 = scalar_select %p30, %s31, %s32
    %p36 = pneg %p30
    %p37 = scmp.eq.s32.totalorder %s9, 1
    %p38 = por %p36, %p37
    %p39 = scmp.ne.s32.totalorder %s31, %s34
    %p40 = scmp.eq.s32.totalorder %s9, 0
    %p41 = por %p39, %p40
    %p42 = scmp.ne.s32.totalorder %s31, %s34
    %p43 = scmp.eq.s32.totalorder %s14, 1
    %p44 = por %p42, %p43
    %p45 = scmp.ne.s32.totalorder %s34, %s35
    %p46 = scmp.eq.s32.totalorder %s14, 0
    %p47 = por %p45, %p46
    %p48 = scmp.ne.s32.totalorder %s34, %s35
    %p49 = scmp.eq.s32.totalorder %s15, 1
    %p50 = por %p48, %p49
    %p52 = scmp.ne.s32.totalorder %s35, %s51
    %p53 = scmp.eq.s32.totalorder %s15, 0
    %p54 = por %p52, %p53
    %s55 = ssub.s32 %s17, %s24
    %p56 = scmp.eq.s32.totalorder %s55, 0
    %s58 = sadd.s32 %s57, 1
    %s59 = scalar_select %p56, %s57, %s58
    %p62 = pneg %p56
    %p63 = scmp.eq.s32.totalorder %s9, 1
    %p64 = por %p62, %p63
    %p65 = scmp.ne.s32.totalorder %s57, %s60
    %p66 = scmp.eq.s32.totalorder %s9, 0
    %p67 = por %p65, %p66
    %p68 = scmp.ne.s32.totalorder %s57, %s60
    %p69 = scmp.eq.s32.totalorder %s14, 1
    %p70 = por %p68, %p69
    %p71 = scmp.ne.s32.totalorder %s60, %s61
    %p72 = scmp.eq.s32.totalorder %s14, 0
    %p73 = por %p71, %p72
    %p74 = scmp.ne.s32.totalorder %s60, %s61
    %p75 = scmp.eq.s32.totalorder %s15, 1
    %p76 = por %p74, %p75
    %p78 = scmp.ne.s32.totalorder %s61, %s77
    %p79 = scmp.eq.s32.totalorder %s15, 0
    %p80 = por %p78, %p79
    %s81 = ssub.s32 %s17, %s24
    %p82 = scmp.eq.s32.totalorder %s81, 0
    %s84 = sadd.s32 %s83, 1
    %s85 = scalar_select %p82, %s83, %s84
    %p88 = pneg %p82
    %p89 = scmp.eq.s32.totalorder %s9, 1
    %p90 = por %p88, %p89
    %p91 = scmp.ne.s32.totalorder %s83, %s86
    %p92 = scmp.eq.s32.totalorder %s9, 0
    %p93 = por %p91, %p92
    %p94 = scmp.ne.s32.totalorder %s83, %s86
    %p95 = scmp.eq.s32.totalorder %s14, 1
    %p96 = por %p94, %p95
    %p97 = scmp.ne.s32.totalorder %s86, %s87
    %p98 = scmp.eq.s32.totalorder %s14, 0
    %p99 = por %p97, %p98
    %p100 = scmp.ne.s32.totalorder %s86, %s87
    %p101 = scmp.eq.s32.totalorder %s15, 1
    %p102 = por %p100, %p101
    %p104 = scmp.ne.s32.totalorder %s87, %s103
    %p105 = scmp.eq.s32.totalorder %s15, 0
    %p106 = por %p104, %p105
    %s107 = ssub.s32 %s16, %s28
    %p108 = scmp.eq.s32.totalorder %s107, 0
    %s110 = sadd.s32 %s109, 1
    %s111 = scalar_select %p108, %s109, %s110
    %p114 = pneg %p108
    %p115 = scmp.eq.s32.totalorder %s9, 1
    %p116 = por %p114, %p115
    %p117 = scmp.ne.s32.totalorder %s109, %s112
    %p118 = scmp.eq.s32.totalorder %s9, 0
    %p119 = por %p117, %p118
    %p120 = scmp.ne.s32.totalorder %s109, %s112
    %p121 = scmp.eq.s32.totalorder %s14, 1
    %p122 = por %p120, %p121
    %p123 = scmp.ne.s32.totalorder %s112, %s113
    %p124 = scmp.eq.s32.totalorder %s14, 0
    %p125 = por %p123, %p124
    %p126 = scmp.ne.s32.totalorder %s112, %s113
    %p127 = scmp.eq.s32.totalorder %s15, 1
    %p128 = por %p126, %p127
    %p130 = scmp.ne.s32.totalorder %s113, %s129
    %p131 = scmp.eq.s32.totalorder %s15, 0
    %p132 = por %p130, %p131
    %p133 = scmp.le.s32.totalorder 1, %s9
    %p134 = scmp.lt.s32.totalorder %s9, 3
    %p135 = pnand %p133, %p134
    %p136 = pneg %p135
    // Predicated region
    $region9: #{potts_forward.1} parent=5 // pred_check
      _
    $region10: #{potts_forward.1} parent=5 // pred_check_branch
      %138 = sbr.rel (%p135) target = $region12
    $region11: #{potts_forward.1} parent=5 // pred_region
      %s139 = ssub.s32 %s9, 1
      // Predicated region
      $region13: #{potts_forward.1} parent=11 // pred_check
        %p140 = pneg %p73
      $region14: #{potts_forward.1} parent=11 // pred_check_branch
        %142 = sbr.rel (%p140) target = $region16
      $region15: #{potts_forward.1} parent=11 // pred_region
        %p143 = scmp.lt.s32.totalorder %s19, 0
        %s144 = scalar_select %p143, %s19, 0
        %s145 = smul.addr %s144, 4
        %s146 = scalar_lea.vmem %s1, %s145
      $region16: #{potts_forward.1} parent=11 // pred_fallthru
        _
      // Predicated region
      $region17: #{potts_forward.1} parent=11 // pred_check
        %p147 = pneg %p99
      $region18: #{potts_forward.1} parent=11 // pred_check_branch
        %149 = sbr.rel (%p147) target = $region20
      $region19: #{potts_forward.1} parent=11 // pred_region
        %s150 = smul.u32 16, %s19
        %p151 = scmp.lt.s32.totalorder %s150, 15
        %s152 = scalar_select %p151, %s150, 15
        %s153 = smul.addr %s152, 8
        %s154 = scalar_lea.vmem %s2, %s153
        %s155 = smul.u32 16, %s19
      $region20: #{potts_forward.1} parent=11 // pred_fallthru
        _
    $region12: #{potts_forward.1} parent=5 // pred_fallthru
      _
    %p156 = scmp.lt.s32.totalorder %s9, 2
    // Predicated region
    $region21: #{potts_forward.1} parent=5 // pred_check
      %p157 = pneg %p156
    $region22: #{potts_forward.1} parent=5 // pred_check_branch
      %159 = sbr.rel (%p157) target = $region24
    $region23: #{potts_forward.1} parent=5 // pred_region
      // Predicated region
      $region25: #{potts_forward.1} parent=23 // pred_check
        %p160 = pneg %p41
      $region26: #{potts_forward.1} parent=23 // pred_check_branch
        %162 = sbr.rel (%p160) target = $region28
      $region27: #{potts_forward.1} parent=23 // pred_region
        %s163 = smul.u32 16, %s16
        %p164 = scmp.lt.s32.totalorder %s163, 31
        %s165 = scalar_select %p164, %s163, 31
        %s166 = smul.addr %s165, 4
        %s167 = scalar_lea.vmem %s0, %s166
        %s168 = smul.u32 16, %s16
      $region28: #{potts_forward.1} parent=23 // pred_fallthru
        _
    $region24: #{potts_forward.1} parent=5 // pred_fallthru
      _
    %p169 = scmp.le.s32.totalorder 1, %s9
    %p170 = scmp.lt.s32.totalorder %s9, 3
    %p171 = pnand %p169, %p170
    %p172 = pneg %p171
    // Predicated region
    $region29: #{potts_forward.1} parent=5 // pred_check
      _
    $region30: #{potts_forward.1} parent=5 // pred_check_branch
      %174 = sbr.rel (%p171) target = $region32
    $region31: #{potts_forward.1} parent=5 // pred_region
      %s175 = ssub.s32 %s9, 1
      %s176 = smul.u32 16, %s18
      %p177 = scmp.lt.s32.totalorder %s176, 31
      %s178 = scalar_select %p177, %s176, 31
      %s179 = smul.addr %s178, 4
      %s180 = scalar_lea.vmem %s0, %s179
      %p181 = pneg %p47
      %p182 = pneg %p44
      %p183 = scmp.lt.s32.totalorder %s19, 0
      %s184 = scalar_select %p183, %s19, 0
      %s185 = smul.addr %s184, 4
      %s186 = scalar_lea.vmem %s1, %s185
      %p187 = pneg %p73
      %p188 = pneg %p70
      %s189 = smul.u32 16, %s19
      %p190 = scmp.lt.s32.totalorder %s189, 15
      %s191 = scalar_select %p190, %s189, 15
      %s192 = smul.addr %s191, 8
      %s193 = scalar_lea.vmem %s2, %s192
      %p194 = pneg %p99
      %p195 = pneg %p96
      %p196 = pneg %p125
      %p197 = pneg %p122
      %s198 = smul.u32 16, %s18
      %p199 = scmp.lt.s32.totalorder %s198, 31
      %s200 = scalar_select %p199, %s198, 31
      %s201 = smul.addr %s200, 8
      %s202 = scalar_lea.vmem %s3, %s201
      %s203 = smul.u32 16, %s18
      %p204 = scmp.lt.s32.totalorder %s203, 31
      %s205 = scalar_select %p204, %s203, 31
      %s206 = smul.addr %s205, 4
      %s207 = scalar_lea.vmem %s0, %s206
      %s208 = smul.u32 16, %s18
      %p209 = scmp.lt.s32.totalorder %s19, 0
      %s210 = scalar_select %p209, %s19, 0
      %s211 = smul.addr %s210, 4
      %s212 = scalar_lea.vmem %s1, %s211
      %s213 = smul.u32 16, %s19
      %p214 = scmp.lt.s32.totalorder %s213, 15
      %s215 = scalar_select %p214, %s213, 15
      %s216 = smul.addr %s215, 8
      %s217 = scalar_lea.vmem %s2, %s216
      %s218 = smul.u32 16, %s19
      %s219 = smul.u32 16, %s18
      %p220 = scmp.lt.s32.totalorder %s219, 31
      %s221 = scalar_select %p220, %s219, 31
      %s222 = smul.addr %s221, 8
      %s223 = scalar_lea.vmem %s3, %s222
      %s224 = smul.u32 16, %s18
      %p226 = scmp.eq.s32.totalorder %s19, 0
      // Predicated region
      $region33: #{potts_forward.1} parent=31 // pred_check
        %p227 = pneg %p226
      $region34: #{potts_forward.1} parent=31 // pred_check_branch
        %229 = sbr.rel (%p227) target = $region36
      $region35: #{potts_forward.1} parent=31 // pred_region
        %vm230 = vcmask 7168
        %231 = vst.msk [vmem:[%s223] sm:$0xff] %vm230, 0.0
        %232 = vst.msk [vmem:[%s223 + $0x8] sm:$0xff] %vm230, 0.0
        %233 = vst.msk [vmem:[%s223 + $0x10] sm:$0xff] %vm230, 0.0
        %234 = vst.msk [vmem:[%s223 + $0x18] sm:$0xff] %vm230, 0.0
        %235 = vst.msk [vmem:[%s223 + $0x20] sm:$0xff] %vm230, 0.0
        %236 = vst.msk [vmem:[%s223 + $0x28] sm:$0xff] %vm230, 0.0
        %237 = vst.msk [vmem:[%s223 + $0x30] sm:$0xff] %vm230, 0.0
        %238 = vst.msk [vmem:[%s223 + $0x38] sm:$0xff] %vm230, 0.0
        %239 = vst.msk [vmem:[%s223 + $0x40] sm:$0xff] %vm230, 0.0
        %240 = vst.msk [vmem:[%s223 + $0x48] sm:$0xff] %vm230, 0.0
        %241 = vst.msk [vmem:[%s223 + $0x50] sm:$0xff] %vm230, 0.0
        %242 = vst.msk [vmem:[%s223 + $0x58] sm:$0xff] %vm230, 0.0
        %243 = vst.msk [vmem:[%s223 + $0x60] sm:$0xff] %vm230, 0.0
        %244 = vst.msk [vmem:[%s223 + $0x68] sm:$0xff] %vm230, 0.0
        %245 = vst.msk [vmem:[%s223 + $0x70] sm:$0xff] %vm230, 0.0
        %246 = vst.msk [vmem:[%s223 + $0x78] sm:$0xff] %vm230, 0.0
      $region36: #{potts_forward.1} parent=31 // pred_fallthru
        _
      %v247 = vld [vmem:[%s207] sm:$0xf]
      %v248 = vld [vmem:[%s207 + $0x4] sm:$0xf]
      %v249 = vld [vmem:[%s207 + $0x8] sm:$0xf]
      %v250 = vld [vmem:[%s207 + $0xc] sm:$0xf]
      %v251 = vld [vmem:[%s207 + $0x10] sm:$0xf]
      %v252 = vld [vmem:[%s207 + $0x14] sm:$0xf]
      %v253 = vld [vmem:[%s207 + $0x18] sm:$0xf]
      %v254 = vld [vmem:[%s207 + $0x1c] sm:$0xf]
      %v255 = vld [vmem:[%s207 + $0x20] sm:$0xf]
      %v256 = vld [vmem:[%s207 + $0x24] sm:$0xf]
      %v257 = vld [vmem:[%s207 + $0x28] sm:$0xf]
      %v258 = vld [vmem:[%s207 + $0x2c] sm:$0xf]
      %v259 = vld [vmem:[%s207 + $0x30] sm:$0xf]
      %v260 = vld [vmem:[%s207 + $0x34] sm:$0xf]
      %v261 = vld [vmem:[%s207 + $0x38] sm:$0xf]
      %v262 = vld [vmem:[%s207 + $0x3c] sm:$0xf]
      %v263 = vld [vmem:[%s212] sm:$0xf]
      %v264 = vld [vmem:[%s212 + $0x4] sm:$0xf]
      %v281 = vunpack.c.l.b16 %v247
      %v282 = vunpack.c.l.b16 %v248
      %v283 = vunpack.c.l.b16 %v249
      %v284 = vunpack.c.l.b16 %v250
      %v285 = vunpack.c.l.b16 %v251
      %v286 = vunpack.c.l.b16 %v252
      %v287 = vunpack.c.l.b16 %v253
      %v288 = vunpack.c.l.b16 %v254
      %v289 = vunpack.c.l.b16 %v255
      %v290 = vunpack.c.l.b16 %v256
      %v291 = vunpack.c.l.b16 %v257
      %v292 = vunpack.c.l.b16 %v258
      %v293 = vunpack.c.l.b16 %v259
      %v294 = vunpack.c.l.b16 %v260
      %v295 = vunpack.c.l.b16 %v261
      %v296 = vunpack.c.l.b16 %v262
      %v297 = vpack.c.b16 %v282, %v281
      %v298 = vpack.c.b16 %v284, %v283
      %v299 = vpack.c.b16 %v286, %v285
      %v300 = vpack.c.b16 %v288, %v287
      %v301 = vpack.c.b16 %v290, %v289
      %v302 = vpack.c.b16 %v292, %v291
      %v303 = vpack.c.b16 %v294, %v293
      %v304 = vpack.c.b16 %v296, %v295
      %v307 = vunpack.c.l.b16 %v263
      %v308 = vunpack.c.l.b16 %v264
      %v309 = vpack.c.b16 %v308, %v307
      %vm311 = vcmask 130048
      %v313 = vsel %vm311, %v297, 0
      %v316 = vsel %vm311, %v298, 0
      %v319 = vsel %vm311, %v299, 0
      %v322 = vsel %vm311, %v300, 0
      %v325 = vsel %vm311, %v301, 0
      %v328 = vsel %vm311, %v302, 0
      %v331 = vsel %vm311, %v303, 0
      %v334 = vsel %vm311, %v304, 0
      %336 = vmatprep.subr.bf16.mxu0 0
      %337 = vmatpush1.bf16.msra.mxu0 %v309
      %338 = vmatprep.subr.bf16.mxu0 0
      %339 = vmatpush1.bf16.msra.mxu0 0
      %340 = vmatprep.subr.bf16.mxu0 0
      %341 = vmatpush1.bf16.msra.mxu0 0
      %342 = vmatprep.subr.bf16.mxu0 0
      %343 = vmatpush1.bf16.msra.mxu0 0
      %344 = vmatprep.subr.bf16.mxu0 0
      %345 = vmatpush1.bf16.msra.mxu0 0
      %346 = vmatprep.subr.bf16.mxu0 0
      %347 = vmatpush1.bf16.msra.mxu0 0
      %348 = vmatprep.subr.bf16.mxu0 0
      %349 = vmatpush1.bf16.msra.mxu0 0
      %350 = vmatprep.subr.bf16.mxu0 0
      %351 = vmatpush1.bf16.msra.mxu0 0
      %352 = vmatprep.subr.bf16.mxu0 0
      %353 = vmatpush1.bf16.msra.mxu0 0
      %354 = vmatprep.subr.bf16.mxu0 0
      %355 = vmatpush1.bf16.msra.mxu0 0
      %356 = vmatprep.subr.bf16.mxu0 0
      %357 = vmatpush1.bf16.msra.mxu0 0
      %358 = vmatprep.subr.bf16.mxu0 0
      %359 = vmatpush1.bf16.msra.mxu0 0
      %360 = vmatprep.subr.bf16.mxu0 0
      %361 = vmatpush1.bf16.msra.mxu0 0
      %362 = vmatprep.subr.bf16.mxu0 0
      %363 = vmatpush1.bf16.msra.mxu0 0
      %364 = vmatprep.subr.bf16.mxu0 0
      %365 = vmatpush1.bf16.msra.mxu0 0
      %366 = vmatprep.subr.bf16.mxu0 0
      %367 = vmatpush1.bf16.msra.mxu0 0
      %368 = vmatprep.mubr.bf16.mxu0 0
      %369 = vmatmul.mubr.bf16.gmra.mrb[0].mxu0 %v313
      %v370 = vpop.f32.mrb[0].mxu0
      %v371 = vadd.f32 0.0, %v370
      %v372 = vpop.f32.mrb[0].mxu0
      %v373 = vpop.f32.mrb[0].mxu0
      %v374 = vadd.f32 0.0, %v373
      %v375 = vpop.f32.mrb[0].mxu0
      %376 = vmatprep.mubr.bf16.mxu0 0
      %377 = vmatmul.mubr.bf16.gmra.mrb[0].mxu0 %v316
      %v378 = vpop.f32.mrb[0].mxu0
      %v379 = vadd.f32 0.0, %v378
      %v380 = vpop.f32.mrb[0].mxu0
      %v381 = vpop.f32.mrb[0].mxu0
      %v382 = vadd.f32 0.0, %v381
      %v383 = vpop.f32.mrb[0].mxu0
      %384 = vmatprep.mubr.bf16.mxu0 0
      %385 = vmatmul.mubr.bf16.gmra.mrb[0].mxu0 %v319
      %v386 = vpop.f32.mrb[0].mxu0
      %v387 = vadd.f32 0.0, %v386
      %v388 = vpop.f32.mrb[0].mxu0
      %v389 = vpop.f32.mrb[0].mxu0
      %v390 = vadd.f32 0.0, %v389
      %v391 = vpop.f32.mrb[0].mxu0
      %392 = vmatprep.mubr.bf16.mxu0 0
      %393 = vmatmul.mubr.bf16.gmra.mrb[0].mxu0 %v322
      %v394 = vpop.f32.mrb[0].mxu0
      %v395 = vadd.f32 0.0, %v394
      %v396 = vpop.f32.mrb[0].mxu0
      %v397 = vpop.f32.mrb[0].mxu0
      %v398 = vadd.f32 0.0, %v397
      %v399 = vpop.f32.mrb[0].mxu0
      %400 = vmatprep.mubr.bf16.mxu0 0
      %401 = vmatmul.mubr.bf16.gmra.mrb[0].mxu0 %v325
      %v402 = vpop.f32.mrb[0].mxu0
      %v403 = vadd.f32 0.0, %v402
      %v404 = vpop.f32.mrb[0].mxu0
      %v405 = vpop.f32.mrb[0].mxu0
      %v406 = vadd.f32 0.0, %v405
      %v407 = vpop.f32.mrb[0].mxu0
      %408 = vmatprep.mubr.bf16.mxu0 0
      %409 = vmatmul.mubr.bf16.gmra.mrb[0].mxu0 %v328
      %v410 = vpop.f32.mrb[0].mxu0
      %v411 = vadd.f32 0.0, %v410
      %v412 = vpop.f32.mrb[0].mxu0
      %v413 = vpop.f32.mrb[0].mxu0
      %v414 = vadd.f32 0.0, %v413
      %v415 = vpop.f32.mrb[0].mxu0
      %416 = vmatprep.mubr.bf16.mxu0 0
      %417 = vmatmul.mubr.bf16.gmra.mrb[0].mxu0 %v331
      %v418 = vpop.f32.mrb[0].mxu0
      %v419 = vadd.f32 0.0, %v418
      %v420 = vpop.f32.mrb[0].mxu0
      %v421 = vpop.f32.mrb[0].mxu0
      %v422 = vadd.f32 0.0, %v421
      %v423 = vpop.f32.mrb[0].mxu0
      %424 = vmatprep.mubr.bf16.mxu0 0
      %425 = vmatmul.mubr.bf16.gmra.mrb[0].mxu0 %v334
      %v426 = vpop.f32.mrb[0].mxu0
      %v427 = vadd.f32 0.0, %v426
      %v428 = vpop.f32.mrb[0].mxu0
      %v429 = vpop.f32.mrb[0].mxu0
      %v430 = vadd.f32 0.0, %v429
      %v431 = vpop.f32.mrb[0].mxu0
      %432 = vdwg.mxu0
      %s433 = scalar_lea.vmem %s212, 8
      %v434 = vld [vmem:[%s433] sm:$0xf]
      %v435 = vld [vmem:[%s433 + $0x4] sm:$0xf]
      %v438 = vunpack.c.l.b16 %v434
      %v439 = vunpack.c.l.b16 %v435
      %v440 = vpack.c.b16 %v439, %v438
      %442 = vmatprep.subr.bf16.mxu0 0
      %443 = vmatpush1.bf16.msra.mxu0 %v440
      %444 = vmatprep.subr.bf16.mxu0 0
      %445 = vmatpush1.bf16.msra.mxu0 0
      %446 = vmatprep.subr.bf16.mxu0 0
      %447 = vmatpush1.bf16.msra.mxu0 0
      %448 = vmatprep.subr.bf16.mxu0 0
      %449 = vmatpush1.bf16.msra.mxu0 0
      %450 = vmatprep.subr.bf16.mxu0 0
      %451 = vmatpush1.bf16.msra.mxu0 0
      %452 = vmatprep.subr.bf16.mxu0 0
      %453 = vmatpush1.bf16.msra.mxu0 0
      %454 = vmatprep.subr.bf16.mxu0 0
      %455 = vmatpush1.bf16.msra.mxu0 0
      %456 = vmatprep.subr.bf16.mxu0 0
      %457 = vmatpush1.bf16.msra.mxu0 0
      %458 = vmatprep.subr.bf16.mxu0 0
      %459 = vmatpush1.bf16.msra.mxu0 0
      %460 = vmatprep.subr.bf16.mxu0 0
      %461 = vmatpush1.bf16.msra.mxu0 0
      %462 = vmatprep.subr.bf16.mxu0 0
      %463 = vmatpush1.bf16.msra.mxu0 0
      %464 = vmatprep.subr.bf16.mxu0 0
      %465 = vmatpush1.bf16.msra.mxu0 0
      %466 = vmatprep.subr.bf16.mxu0 0
      %467 = vmatpush1.bf16.msra.mxu0 0
      %468 = vmatprep.subr.bf16.mxu0 0
      %469 = vmatpush1.bf16.msra.mxu0 0
      %470 = vmatprep.subr.bf16.mxu0 0
      %471 = vmatpush1.bf16.msra.mxu0 0
      %472 = vmatprep.subr.bf16.mxu0 0
      %473 = vmatpush1.bf16.msra.mxu0 0
      %474 = vmatprep.mubr.bf16.mxu0 0
      %475 = vmatmul.mubr.bf16.gmra.mrb[0].mxu0 %v313
      %v476 = vpop.f32.mrb[0].mxu0
      %v477 = vadd.f32 0.0, %v476
      %v478 = vpop.f32.mrb[0].mxu0
      %v479 = vpop.f32.mrb[0].mxu0
      %v480 = vadd.f32 0.0, %v479
      %v481 = vpop.f32.mrb[0].mxu0
      %482 = vmatprep.mubr.bf16.mxu0 0
      %483 = vmatmul.mubr.bf16.gmra.mrb[0].mxu0 %v316
      %v484 = vpop.f32.mrb[0].mxu0
      %v485 = vadd.f32 0.0, %v484
      %v486 = vpop.f32.mrb[0].mxu0
      %v487 = vpop.f32.mrb[0].mxu0
      %v488 = vadd.f32 0.0, %v487
      %v489 = vpop.f32.mrb[0].mxu0
      %490 = vmatprep.mubr.bf16.mxu0 0
      %491 = vmatmul.mubr.bf16.gmra.mrb[0].mxu0 %v319
      %v492 = vpop.f32.mrb[0].mxu0
      %v493 = vadd.f32 0.0, %v492
      %v494 = vpop.f32.mrb[0].mxu0
      %v495 = vpop.f32.mrb[0].mxu0
      %v496 = vadd.f32 0.0, %v495
      %v497 = vpop.f32.mrb[0].mxu0
      %498 = vmatprep.mubr.bf16.mxu0 0
      %499 = vmatmul.mubr.bf16.gmra.mrb[0].mxu0 %v322
      %v500 = vpop.f32.mrb[0].mxu0
      %v501 = vadd.f32 0.0, %v500
      %v502 = vpop.f32.mrb[0].mxu0
      %v503 = vpop.f32.mrb[0].mxu0
      %v504 = vadd.f32 0.0, %v503
      %v505 = vpop.f32.mrb[0].mxu0
      %506 = vmatprep.mubr.bf16.mxu0 0
      %507 = vmatmul.mubr.bf16.gmra.mrb[0].mxu0 %v325
      %v508 = vpop.f32.mrb[0].mxu0
      %v509 = vadd.f32 0.0, %v508
      %v510 = vpop.f32.mrb[0].mxu0
      %v511 = vpop.f32.mrb[0].mxu0
      %v512 = vadd.f32 0.0, %v511
      %v513 = vpop.f32.mrb[0].mxu0
      %514 = vmatprep.mubr.bf16.mxu0 0
      %515 = vmatmul.mubr.bf16.gmra.mrb[0].mxu0 %v328
      %v516 = vpop.f32.mrb[0].mxu0
      %v517 = vadd.f32 0.0, %v516
      %v518 = vpop.f32.mrb[0].mxu0
      %v519 = vpop.f32.mrb[0].mxu0
      %v520 = vadd.f32 0.0, %v519
      %v521 = vpop.f32.mrb[0].mxu0
      %522 = vmatprep.mubr.bf16.mxu0 0
      %523 = vmatmul.mubr.bf16.gmra.mrb[0].mxu0 %v331
      %v524 = vpop.f32.mrb[0].mxu0
      %v525 = vadd.f32 0.0, %v524
      %v526 = vpop.f32.mrb[0].mxu0
      %v527 = vpop.f32.mrb[0].mxu0
      %v528 = vadd.f32 0.0, %v527
      %v529 = vpop.f32.mrb[0].mxu0
      %530 = vmatprep.mubr.bf16.mxu0 0
      %531 = vmatmul.mubr.bf16.gmra.mrb[0].mxu0 %v334
      %v532 = vpop.f32.mrb[0].mxu0
      %v533 = vadd.f32 0.0, %v532
      %v534 = vpop.f32.mrb[0].mxu0
      %v535 = vpop.f32.mrb[0].mxu0
      %v536 = vadd.f32 0.0, %v535
      %v537 = vpop.f32.mrb[0].mxu0
      %538 = vdwg.mxu0
      %v539 = vmax.f32 %v371, %v477
      %v540 = vmax.f32 %v374, %v480
      %v541 = vmax.f32 %v379, %v485
      %v542 = vmax.f32 %v382, %v488
      %v543 = vmax.f32 %v387, %v493
      %v544 = vmax.f32 %v390, %v496
      %v545 = vmax.f32 %v395, %v501
      %v546 = vmax.f32 %v398, %v504
      %v547 = vmax.f32 %v403, %v509
      %v548 = vmax.f32 %v406, %v512
      %v549 = vmax.f32 %v411, %v517
      %v550 = vmax.f32 %v414, %v520
      %v551 = vmax.f32 %v419, %v525
      %v552 = vmax.f32 %v422, %v528
      %v553 = vmax.f32 %v427, %v533
      %v554 = vmax.f32 %v430, %v536
      %v555 = vmin.f32 %v371, %v477
      %v556 = vmin.f32 %v374, %v480
      %v557 = vmin.f32 %v379, %v485
      %v558 = vmin.f32 %v382, %v488
      %v559 = vmin.f32 %v387, %v493
      %v560 = vmin.f32 %v390, %v496
      %v561 = vmin.f32 %v395, %v501
      %v562 = vmin.f32 %v398, %v504
      %v563 = vmin.f32 %v403, %v509
      %v564 = vmin.f32 %v406, %v512
      %v565 = vmin.f32 %v411, %v517
      %v566 = vmin.f32 %v414, %v520
      %v567 = vmin.f32 %v419, %v525
      %v568 = vmin.f32 %v422, %v528
      %v569 = vmin.f32 %v427, %v533
      %v570 = vmin.f32 %v430, %v536
      %s571 = scalar_lea.vmem %s212, 16
      %v572 = vld [vmem:[%s571] sm:$0xf]
      %v573 = vld [vmem:[%s571 + $0x4] sm:$0xf]
      %v576 = vunpack.c.l.b16 %v572
      %v577 = vunpack.c.l.b16 %v573
      %v578 = vpack.c.b16 %v577, %v576
      %580 = vmatprep.subr.bf16.mxu0 0
      %581 = vmatpush1.bf16.msra.mxu0 %v578
      %582 = vmatprep.subr.bf16.mxu0 0
      %583 = vmatpush1.bf16.msra.mxu0 0
      %584 = vmatprep.subr.bf16.mxu0 0
      %585 = vmatpush1.bf16.msra.mxu0 0
      %586 = vmatprep.subr.bf16.mxu0 0
      %587 = vmatpush1.bf16.msra.mxu0 0
      %588 = vmatprep.subr.bf16.mxu0 0
      %589 = vmatpush1.bf16.msra.mxu0 0
      %590 = vmatprep.subr.bf16.mxu0 0
      %591 = vmatpush1.bf16.msra.mxu0 0
      %592 = vmatprep.subr.bf16.mxu0 0
      %593 = vmatpush1.bf16.msra.mxu0 0
      %594 = vmatprep.subr.bf16.mxu0 0
      %595 = vmatpush1.bf16.msra.mxu0 0
      %596 = vmatprep.subr.bf16.mxu0 0
      %597 = vmatpush1.bf16.msra.mxu0 0
      %598 = vmatprep.subr.bf16.mxu0 0
      %599 = vmatpush1.bf16.msra.mxu0 0
      %600 = vmatprep.subr.bf16.mxu0 0
      %601 = vmatpush1.bf16.msra.mxu0 0
      %602 = vmatprep.subr.bf16.mxu0 0
      %603 = vmatpush1.bf16.msra.mxu0 0
      %604 = vmatprep.subr.bf16.mxu0 0
      %605 = vmatpush1.bf16.msra.mxu0 0
      %606 = vmatprep.subr.bf16.mxu0 0
      %607 = vmatpush1.bf16.msra.mxu0 0
      %608 = vmatprep.subr.bf16.mxu0 0
      %609 = vmatpush1.bf16.msra.mxu0 0
      %610 = vmatprep.subr.bf16.mxu0 0
      %611 = vmatpush1.bf16.msra.mxu0 0
      %612 = vmatprep.mubr.bf16.mxu0 0
      %613 = vmatmul.mubr.bf16.gmra.mrb[0].mxu0 %v313
      %v614 = vpop.f32.mrb[0].mxu0
      %v615 = vadd.f32 0.0, %v614
      %v616 = vpop.f32.mrb[0].mxu0
      %v617 = vpop.f32.mrb[0].mxu0
      %v618 = vadd.f32 0.0, %v617
      %v619 = vpop.f32.mrb[0].mxu0
      %620 = vmatprep.mubr.bf16.mxu0 0
      %621 = vmatmul.mubr.bf16.gmra.mrb[0].mxu0 %v316
      %v622 = vpop.f32.mrb[0].mxu0
      %v623 = vadd.f32 0.0, %v622
      %v624 = vpop.f32.mrb[0].mxu0
      %v625 = vpop.f32.mrb[0].mxu0
      %v626 = vadd.f32 0.0, %v625
      %v627 = vpop.f32.mrb[0].mxu0
      %628 = vmatprep.mubr.bf16.mxu0 0
      %629 = vmatmul.mubr.bf16.gmra.mrb[0].mxu0 %v319
      %v630 = vpop.f32.mrb[0].mxu0
      %v631 = vadd.f32 0.0, %v630
      %v632 = vpop.f32.mrb[0].mxu0
      %v633 = vpop.f32.mrb[0].mxu0
      %v634 = vadd.f32 0.0, %v633
      %v635 = vpop.f32.mrb[0].mxu0
      %636 = vmatprep.mubr.bf16.mxu0 0
      %637 = vmatmul.mubr.bf16.gmra.mrb[0].mxu0 %v322
      %v638 = vpop.f32.mrb[0].mxu0
      %v639 = vadd.f32 0.0, %v638
      %v640 = vpop.f32.mrb[0].mxu0
      %v641 = vpop.f32.mrb[0].mxu0
      %v642 = vadd.f32 0.0, %v641
      %v643 = vpop.f32.mrb[0].mxu0
      %644 = vmatprep.mubr.bf16.mxu0 0
      %645 = vmatmul.mubr.bf16.gmra.mrb[0].mxu0 %v325
      %v646 = vpop.f32.mrb[0].mxu0
      %v647 = vadd.f32 0.0, %v646
      %v648 = vpop.f32.mrb[0].mxu0
      %v649 = vpop.f32.mrb[0].mxu0
      %v650 = vadd.f32 0.0, %v649
      %v651 = vpop.f32.mrb[0].mxu0
      %652 = vmatprep.mubr.bf16.mxu0 0
      %653 = vmatmul.mubr.bf16.gmra.mrb[0].mxu0 %v328
      %v654 = vpop.f32.mrb[0].mxu0
      %v655 = vadd.f32 0.0, %v654
      %v656 = vpop.f32.mrb[0].mxu0
      %v657 = vpop.f32.mrb[0].mxu0
      %v658 = vadd.f32 0.0, %v657
      %v659 = vpop.f32.mrb[0].mxu0
      %660 = vmatprep.mubr.bf16.mxu0 0
      %661 = vmatmul.mubr.bf16.gmra.mrb[0].mxu0 %v331
      %v662 = vpop.f32.mrb[0].mxu0
      %v663 = vadd.f32 0.0, %v662
      %v664 = vpop.f32.mrb[0].mxu0
      %v665 = vpop.f32.mrb[0].mxu0
      %v666 = vadd.f32 0.0, %v665
      %v667 = vpop.f32.mrb[0].mxu0
      %668 = vmatprep.mubr.bf16.mxu0 0
      %669 = vmatmul.mubr.bf16.gmra.mrb[0].mxu0 %v334
      %v670 = vpop.f32.mrb[0].mxu0
      %v671 = vadd.f32 0.0, %v670
      %v672 = vpop.f32.mrb[0].mxu0
      %v673 = vpop.f32.mrb[0].mxu0
      %v674 = vadd.f32 0.0, %v673
      %v675 = vpop.f32.mrb[0].mxu0
      %676 = vdwg.mxu0
      %v677 = vmax.f32 %v539, %v615
      %v678 = vmax.f32 %v540, %v618
      %v679 = vmax.f32 %v541, %v623
      %v680 = vmax.f32 %v542, %v626
      %v681 = vmax.f32 %v543, %v631
      %v682 = vmax.f32 %v544, %v634
      %v683 = vmax.f32 %v545, %v639
      %v684 = vmax.f32 %v546, %v642
      %v685 = vmax.f32 %v547, %v647
      %v686 = vmax.f32 %v548, %v650
      %v687 = vmax.f32 %v549, %v655
      %v688 = vmax.f32 %v550, %v658
      %v689 = vmax.f32 %v551, %v663
      %v690 = vmax.f32 %v552, %v666
      %v691 = vmax.f32 %v553, %v671
      %v692 = vmax.f32 %v554, %v674
      %v693 = vmin.f32 %v555, %v615
      %v694 = vmin.f32 %v556, %v618
      %v695 = vmin.f32 %v557, %v623
      %v696 = vmin.f32 %v558, %v626
      %v697 = vmin.f32 %v559, %v631
      %v698 = vmin.f32 %v560, %v634
      %v699 = vmin.f32 %v561, %v639
      %v700 = vmin.f32 %v562, %v642
      %v701 = vmin.f32 %v563, %v647
      %v702 = vmin.f32 %v564, %v650
      %v703 = vmin.f32 %v565, %v655
      %v704 = vmin.f32 %v566, %v658
      %v705 = vmin.f32 %v567, %v663
      %v706 = vmin.f32 %v568, %v666
      %v707 = vmin.f32 %v569, %v671
      %v708 = vmin.f32 %v570, %v674
      %vm709 = vcmp.eq.f32.partialorder %v677, %v693
      %vm710 = vcmp.eq.f32.partialorder %v678, %v694
      %vm711 = vcmp.eq.f32.partialorder %v679, %v695
      %vm712 = vcmp.eq.f32.partialorder %v680, %v696
      %vm713 = vcmp.eq.f32.partialorder %v681, %v697
      %vm714 = vcmp.eq.f32.partialorder %v682, %v698
      %vm715 = vcmp.eq.f32.partialorder %v683, %v699
      %vm716 = vcmp.eq.f32.partialorder %v684, %v700
      %vm717 = vcmp.eq.f32.partialorder %v685, %v701
      %vm718 = vcmp.eq.f32.partialorder %v686, %v702
      %vm719 = vcmp.eq.f32.partialorder %v687, %v703
      %vm720 = vcmp.eq.f32.partialorder %v688, %v704
      %vm721 = vcmp.eq.f32.partialorder %v689, %v705
      %vm722 = vcmp.eq.f32.partialorder %v690, %v706
      %vm723 = vcmp.eq.f32.partialorder %v691, %v707
      %vm724 = vcmp.eq.f32.partialorder %v692, %v708
      %v725 = vsel %vm709, 1, 0
      %v726 = vsel %vm710, 1, 0
      %v727 = vsel %vm711, 1, 0
      %v728 = vsel %vm712, 1, 0
      %v729 = vsel %vm713, 1, 0
      %v730 = vsel %vm714, 1, 0
      %v731 = vsel %vm715, 1, 0
      %v732 = vsel %vm716, 1, 0
      %v733 = vsel %vm717, 1, 0
      %v734 = vsel %vm718, 1, 0
      %v735 = vsel %vm719, 1, 0
      %v736 = vsel %vm720, 1, 0
      %v737 = vsel %vm721, 1, 0
      %v738 = vsel %vm722, 1, 0
      %v739 = vsel %vm723, 1, 0
      %v740 = vsel %vm724, 1, 0
      %v741 = vcvt.s32.f32 %v725
      %v742 = vcvt.s32.f32 %v726
      %v743 = vcvt.s32.f32 %v727
      %v744 = vcvt.s32.f32 %v728
      %v745 = vcvt.s32.f32 %v729
      %v746 = vcvt.s32.f32 %v730
      %v747 = vcvt.s32.f32 %v731
      %v748 = vcvt.s32.f32 %v732
      %v749 = vcvt.s32.f32 %v733
      %v750 = vcvt.s32.f32 %v734
      %v751 = vcvt.s32.f32 %v735
      %v752 = vcvt.s32.f32 %v736
      %v753 = vcvt.s32.f32 %v737
      %v754 = vcvt.s32.f32 %v738
      %v755 = vcvt.s32.f32 %v739
      %v756 = vcvt.s32.f32 %v740
      %v757 = vld [vmem:[%s223] sm:$0xff]
      %v758 = vld [vmem:[%s223 + $0x8] sm:$0xff]
      %v759 = vld [vmem:[%s223 + $0x10] sm:$0xff]
      %v760 = vld [vmem:[%s223 + $0x18] sm:$0xff]
      %v761 = vld [vmem:[%s223 + $0x20] sm:$0xff]
      %v762 = vld [vmem:[%s223 + $0x28] sm:$0xff]
      %v763 = vld [vmem:[%s223 + $0x30] sm:$0xff]
      %v764 = vld [vmem:[%s223 + $0x38] sm:$0xff]
      %v765 = vld [vmem:[%s223 + $0x40] sm:$0xff]
      %v766 = vld [vmem:[%s223 + $0x48] sm:$0xff]
      %v767 = vld [vmem:[%s223 + $0x50] sm:$0xff]
      %v768 = vld [vmem:[%s223 + $0x58] sm:$0xff]
      %v769 = vld [vmem:[%s223 + $0x60] sm:$0xff]
      %v770 = vld [vmem:[%s223 + $0x68] sm:$0xff]
      %v771 = vld [vmem:[%s223 + $0x70] sm:$0xff]
      %v772 = vld [vmem:[%s223 + $0x78] sm:$0xff]
      %v773 = vld [vmem:[%s217] sm:$0xff]
      %v774 = vld [vmem:[%s217 + $0x8] sm:$0xff]
      %v775 = vld [vmem:[%s217 + $0x10] sm:$0xff]
      %v776 = vld [vmem:[%s217 + $0x18] sm:$0xff]
      %v777 = vld [vmem:[%s217 + $0x20] sm:$0xff]
      %v778 = vld [vmem:[%s217 + $0x28] sm:$0xff]
      %v779 = vld [vmem:[%s217 + $0x30] sm:$0xff]
      %v780 = vld [vmem:[%s217 + $0x38] sm:$0xff]
      %v781 = vld [vmem:[%s217 + $0x40] sm:$0xff]
      %v782 = vld [vmem:[%s217 + $0x48] sm:$0xff]
      %v783 = vld [vmem:[%s217 + $0x50] sm:$0xff]
      %v784 = vld [vmem:[%s217 + $0x58] sm:$0xff]
      %v785 = vld [vmem:[%s217 + $0x60] sm:$0xff]
      %v786 = vld [vmem:[%s217 + $0x68] sm:$0xff]
      %v787 = vld [vmem:[%s217 + $0x70] sm:$0xff]
      %v788 = vld [vmem:[%s217 + $0x78] sm:$0xff]
      %789 = vmatprep.subr.mxu0 0.0
      %790 = vmatpush1.msra.mxu0 %v773
      %791 = vmatprep.subr.mxu0 0.0
      %792 = vmatpush1.msra.mxu0 %v774
      %793 = vmatprep.subr.mxu0 0.0
      %794 = vmatpush1.msra.mxu0 %v775
      %795 = vmatprep.subr.mxu0 0.0
      %796 = vmatpush1.msra.mxu0 %v776
      %797 = vmatprep.subr.mxu0 0.0
      %798 = vmatpush1.msra.mxu0 %v777
      %799 = vmatprep.subr.mxu0 0.0
      %800 = vmatpush1.msra.mxu0 %v778
      %801 = vmatprep.subr.mxu0 0.0
      %802 = vmatpush1.msra.mxu0 %v779
      %803 = vmatprep.subr.mxu0 0.0
      %804 = vmatpush1.msra.mxu0 %v780
      %805 = vmatprep.subr.mxu0 0.0
      %806 = vmatpush1.msra.mxu0 %v781
      %807 = vmatprep.subr.mxu0 0.0
      %808 = vmatpush1.msra.mxu0 %v782
      %809 = vmatprep.subr.mxu0 0.0
      %810 = vmatpush1.msra.mxu0 %v783
      %811 = vmatprep.subr.mxu0 0.0
      %812 = vmatpush1.msra.mxu0 %v784
      %813 = vmatprep.subr.mxu0 0.0
      %814 = vmatpush1.msra.mxu0 %v785
      %815 = vmatprep.subr.mxu0 0.0
      %816 = vmatpush1.msra.mxu0 %v786
      %817 = vmatprep.subr.mxu0 0.0
      %818 = vmatpush1.msra.mxu0 %v787
      %819 = vmatprep.subr.mxu0 0.0
      %820 = vmatpush1.msra.mxu0 %v788
      %821 = vmatprep.subr.mxu0 0.0
      %822 = vmatpush1.msra.mxu0 0.0
      %823 = vmatprep.subr.mxu0 0.0
      %824 = vmatpush1.msra.mxu0 0.0
      %825 = vmatprep.subr.mxu0 0.0
      %826 = vmatpush1.msra.mxu0 0.0
      %827 = vmatprep.subr.mxu0 0.0
      %828 = vmatpush1.msra.mxu0 0.0
      %829 = vmatprep.subr.mxu0 0.0
      %830 = vmatpush1.msra.mxu0 0.0
      %831 = vmatprep.subr.mxu0 0.0
      %832 = vmatpush1.msra.mxu0 0.0
      %833 = vmatprep.subr.mxu0 0.0
      %834 = vmatpush1.msra.mxu0 0.0
      %835 = vmatprep.subr.mxu0 0.0
      %836 = vmatpush1.msra.mxu0 0.0
      %837 = vmatprep.subr.mxu0 0.0
      %838 = vmatpush1.msra.mxu0 0.0
      %839 = vmatprep.subr.mxu0 0.0
      %840 = vmatpush1.msra.mxu0 0.0
      %841 = vmatprep.subr.mxu0 0.0
      %842 = vmatpush1.msra.mxu0 0.0
      %843 = vmatprep.subr.mxu0 0.0
      %844 = vmatpush1.msra.mxu0 0.0
      %845 = vmatprep.subr.mxu0 0.0
      %846 = vmatpush1.msra.mxu0 0.0
      %847 = vmatprep.subr.mxu0 0.0
      %848 = vmatpush1.msra.mxu0 0.0
      %849 = vmatprep.subr.mxu0 0.0
      %850 = vmatpush1.msra.mxu0 0.0
      %851 = vmatprep.subr.mxu0 0.0
      %852 = vmatpush1.msra.mxu0 0.0
      %853 = vmatprep.mubr.f32.mxu0 0.0
      %854 = vmatmul.mubr.f32.gmra.mrb[0].mxu0 %v741
      %v855 = vpop.f32.mrb[0].mxu0
      %v856 = vadd.f32 0.0, %v855
      %v857 = vpop.f32.mrb[0].mxu0
      %858 = vmatprep.mubr.f32.mxu0 0.0
      %859 = vmatmul.mubr.f32.gmra.mrb[0].mxu0 %v742
      %v860 = vpop.f32.mrb[0].mxu0
      %v861 = vadd.f32 0.0, %v860
      %v862 = vpop.f32.mrb[0].mxu0
      %863 = vmatprep.mubr.f32.mxu0 0.0
      %864 = vmatmul.mubr.f32.gmra.mrb[0].mxu0 %v743
      %v865 = vpop.f32.mrb[0].mxu0
      %v866 = vadd.f32 0.0, %v865
      %v867 = vpop.f32.mrb[0].mxu0
      %868 = vmatprep.mubr.f32.mxu0 0.0
      %869 = vmatmul.mubr.f32.gmra.mrb[0].mxu0 %v744
      %v870 = vpop.f32.mrb[0].mxu0
      %v871 = vadd.f32 0.0, %v870
      %v872 = vpop.f32.mrb[0].mxu0
      %873 = vmatprep.mubr.f32.mxu0 0.0
      %874 = vmatmul.mubr.f32.gmra.mrb[0].mxu0 %v745
      %v875 = vpop.f32.mrb[0].mxu0
      %v876 = vadd.f32 0.0, %v875
      %v877 = vpop.f32.mrb[0].mxu0
      %878 = vmatprep.mubr.f32.mxu0 0.0
      %879 = vmatmul.mubr.f32.gmra.mrb[0].mxu0 %v746
      %v880 = vpop.f32.mrb[0].mxu0
      %v881 = vadd.f32 0.0, %v880
      %v882 = vpop.f32.mrb[0].mxu0
      %883 = vmatprep.mubr.f32.mxu0 0.0
      %884 = vmatmul.mubr.f32.gmra.mrb[0].mxu0 %v747
      %v885 = vpop.f32.mrb[0].mxu0
      %v886 = vadd.f32 0.0, %v885
      %v887 = vpop.f32.mrb[0].mxu0
      %888 = vmatprep.mubr.f32.mxu0 0.0
      %889 = vmatmul.mubr.f32.gmra.mrb[0].mxu0 %v748
      %v890 = vpop.f32.mrb[0].mxu0
      %v891 = vadd.f32 0.0, %v890
      %v892 = vpop.f32.mrb[0].mxu0
      %893 = vmatprep.mubr.f32.mxu0 0.0
      %894 = vmatmul.mubr.f32.gmra.mrb[0].mxu0 %v749
      %v895 = vpop.f32.mrb[0].mxu0
      %v896 = vadd.f32 0.0, %v895
      %v897 = vpop.f32.mrb[0].mxu0
      %898 = vmatprep.mubr.f32.mxu0 0.0
      %899 = vmatmul.mubr.f32.gmra.mrb[0].mxu0 %v750
      %v900 = vpop.f32.mrb[0].mxu0
      %v901 = vadd.f32 0.0, %v900
      %v902 = vpop.f32.mrb[0].mxu0
      %903 = vmatprep.mubr.f32.mxu0 0.0
      %904 = vmatmul.mubr.f32.gmra.mrb[0].mxu0 %v751
      %v905 = vpop.f32.mrb[0].mxu0
      %v906 = vadd.f32 0.0, %v905
      %v907 = vpop.f32.mrb[0].mxu0
      %908 = vmatprep.mubr.f32.mxu0 0.0
      %909 = vmatmul.mubr.f32.gmra.mrb[0].mxu0 %v752
      %v910 = vpop.f32.mrb[0].mxu0
      %v911 = vadd.f32 0.0, %v910
      %v912 = vpop.f32.mrb[0].mxu0
      %913 = vmatprep.mubr.f32.mxu0 0.0
      %914 = vmatmul.mubr.f32.gmra.mrb[0].mxu0 %v753
      %v915 = vpop.f32.mrb[0].mxu0
      %v916 = vadd.f32 0.0, %v915
      %v917 = vpop.f32.mrb[0].mxu0
      %918 = vmatprep.mubr.f32.mxu0 0.0
      %919 = vmatmul.mubr.f32.gmra.mrb[0].mxu0 %v754
      %v920 = vpop.f32.mrb[0].mxu0
      %v921 = vadd.f32 0.0, %v920
      %v922 = vpop.f32.mrb[0].mxu0
      %923 = vmatprep.mubr.f32.mxu0 0.0
      %924 = vmatmul.mubr.f32.gmra.mrb[0].mxu0 %v755
      %v925 = vpop.f32.mrb[0].mxu0
      %v926 = vadd.f32 0.0, %v925
      %v927 = vpop.f32.mrb[0].mxu0
      %928 = vmatprep.mubr.f32.mxu0 0.0
      %929 = vmatmul.mubr.f32.gmra.mrb[0].mxu0 %v756
      %v930 = vpop.f32.mrb[0].mxu0
      %v931 = vadd.f32 0.0, %v930
      %v932 = vpop.f32.mrb[0].mxu0
      %933 = vdwg.mxu0
      %v934 = vadd.f32 %v757, %v856
      %v935 = vadd.f32 %v758, %v861
      %v936 = vadd.f32 %v759, %v866
      %v937 = vadd.f32 %v760, %v871
      %v938 = vadd.f32 %v761, %v876
      %v939 = vadd.f32 %v762, %v881
      %v940 = vadd.f32 %v763, %v886
      %v941 = vadd.f32 %v764, %v891
      %v942 = vadd.f32 %v765, %v896
      %v943 = vadd.f32 %v766, %v901
      %v944 = vadd.f32 %v767, %v906
      %v945 = vadd.f32 %v768, %v911
      %v946 = vadd.f32 %v769, %v916
      %v947 = vadd.f32 %v770, %v921
      %v948 = vadd.f32 %v771, %v926
      %v949 = vadd.f32 %v772, %v931
      %vm950 = vcmask 7168
      %951 = vst.msk [vmem:[%s223] sm:$0xff] %vm950, %v934
      %952 = vst.msk [vmem:[%s223 + $0x8] sm:$0xff] %vm950, %v935
      %953 = vst.msk [vmem:[%s223 + $0x10] sm:$0xff] %vm950, %v936
      %954 = vst.msk [vmem:[%s223 + $0x18] sm:$0xff] %vm950, %v937
      %955 = vst.msk [vmem:[%s223 + $0x20] sm:$0xff] %vm950, %v938
      %956 = vst.msk [vmem:[%s223 + $0x28] sm:$0xff] %vm950, %v939
      %957 = vst.msk [vmem:[%s223 + $0x30] sm:$0xff] %vm950, %v940
      %958 = vst.msk [vmem:[%s223 + $0x38] sm:$0xff] %vm950, %v941
      %959 = vst.msk [vmem:[%s223 + $0x40] sm:$0xff] %vm950, %v942
      %960 = vst.msk [vmem:[%s223 + $0x48] sm:$0xff] %vm950, %v943
      %961 = vst.msk [vmem:[%s223 + $0x50] sm:$0xff] %vm950, %v944
      %962 = vst.msk [vmem:[%s223 + $0x58] sm:$0xff] %vm950, %v945
      %963 = vst.msk [vmem:[%s223 + $0x60] sm:$0xff] %vm950, %v946
      %964 = vst.msk [vmem:[%s223 + $0x68] sm:$0xff] %vm950, %v947
      %965 = vst.msk [vmem:[%s223 + $0x70] sm:$0xff] %vm950, %v948
      %966 = vst.msk [vmem:[%s223 + $0x78] sm:$0xff] %vm950, %v949
      %s967 = smul.u32 16, %s18
      %p968 = scmp.lt.s32.totalorder %s967, 31
      %s969 = scalar_select %p968, %s967, 31
      %s970 = smul.addr %s969, 8
      %s971 = scalar_lea.vmem %s3, %s970
      // Predicated region
      $region37: #{potts_forward.1} parent=31 // pred_check
        %p972 = pneg %p122
      $region38: #{potts_forward.1} parent=31 // pred_check_branch
        %974 = sbr.rel (%p972) target = $region40
      $region39: #{potts_forward.1} parent=31 // pred_region
        %s975 = smul.u32 16, %s18
      $region40: #{potts_forward.1} parent=31 // pred_fallthru
        _
    $region32: #{potts_forward.1} parent=5 // pred_fallthru
      _
    %p976 = scmp.le.s32.totalorder 2, %s9
    // Predicated region
    $region41: #{potts_forward.1} parent=5 // pred_check
      %p977 = pneg %p976
    $region42: #{potts_forward.1} parent=5 // pred_check_branch
      %979 = sbr.rel (%p977) target = $region44
    $region43: #{potts_forward.1} parent=5 // pred_region
      %s980 = ssub.s32 %s9, 2
      // Predicated region
      $region45: #{potts_forward.1} parent=43 // pred_check
        %p981 = pneg %p128
      $region46: #{potts_forward.1} parent=43 // pred_check_branch
        %983 = sbr.rel (%p981) target = $region48
      $region47: #{potts_forward.1} parent=43 // pred_region
        %s984 = smul.u32 16, %s20
        %p985 = scmp.lt.s32.totalorder %s984, 31
        %s986 = scalar_select %p985, %s984, 31
        %s987 = smul.addr %s986, 8
        %s988 = scalar_lea.vmem %s3, %s987
      $region48: #{potts_forward.1} parent=43 // pred_fallthru
        _
    $region44: #{potts_forward.1} parent=5 // pred_fallthru
      _
  $region6: #{potts_forward.1} parent=0 // loop_footer
    %s13 = sadd.s32 1, %s9
  $region7: #{potts_forward.1} parent=0 // loop_footer_branch
    %8 = sbr.rel target = $region3
  $region8: #{potts_forward.1} parent=0 // loop_exit
    _

</llo_original>
